<compile_context>
chip_gen: v6e
topology: v6e:2x2x1
jax: 0.10.0
libtpu: 0.0.40
codegen_flags: <defaults>
</compile_context>

<pallas_src>
import jax
import jax.numpy as jnp
from jax.experimental import pallas as pl
from jax.experimental.pallas import tpu as pltpu


def _round_up(x, m):
    return ((x + m - 1) // m) * m


def _vmem_capacity_bytes():
    """Physical VMEM per core; falls back to the smallest (v7x, 64 MiB)."""
    try:
        info = pltpu.get_tpu_info()
        for attr in ("vmem_capacity_bytes", "vmem_bytes"):
            cap = getattr(info, attr, None)
            if cap:
                return int(cap)
    except Exception:
        pass
    return 64 * 1024 * 1024


def _bar_dist_kernel(lower_ref, upper_ref, logw_ref, logits_ref, y_ref, out_ref):
    # lower_ref / upper_ref / logw_ref : (1, num_bars)   (replicated across grid)
    # logits_ref                       : (row_tile, num_bars), native caller dtype
    # y_ref / out_ref                  : (row_tile, 1), float32
    lower = lower_ref[...]                        # (1, B) bucket lower edges (-inf for bucket 0)
    upper = upper_ref[...]                        # (1, B) bucket upper edges
    logw = logw_ref[...]                          # (1, B) log(bucket_widths)
    logits = logits_ref[...].astype(jnp.float32)  # (T, B) cast in-kernel (native-dtype stream)
    y = y_ref[...]                                # (T, 1)

    # log_softmax pieces (lse subtracted after the gather, on the (T,1) result)
    m = jnp.max(logits, axis=-1, keepdims=True)                      # (T, 1)
    shifted = logits - m                                             # (T, B)
    sumexp = jnp.sum(jnp.exp(shifted), axis=-1, keepdims=True)       # (T, 1)

    # Bucket membership straight from the borders:
    #   bucket i <=> borders[i] < y <= borders[i+1]; bucket 0 also takes y == borders[0]
    # (lower[0] is -inf so the left edge lands in bucket 0). Matches
    # searchsorted(..., side='left') - 1 with the PyTorch edge fixes.
    onehot = jnp.logical_and(y > lower, y <= upper)                  # (T, B)

    gathered = jnp.sum(jnp.where(onehot, shifted - logw, 0.0),
                       axis=-1, keepdims=True)                       # (T, 1)
    out_ref[...] = gathered - jnp.log(sumexp)


def bar_distribution_forward(borders, logits, y):
    """Pallas implementation of BarDistribution.forward.

    borders: (num_bars + 1,) sorted, float32
    logits : (..., num_bars), any float dtype (streamed natively, computed in f32)
    y      : logits.shape[:-1]
    returns: float32 array of shape y.shape — the scaled bucket log-prob gathered
             at each target's bucket (same sign convention as the PyTorch forward).

    Out-of-support y (outside [borders[0], borders[-1]]) is not asserted on
    (the PyTorch module raises); values below borders[0] fall into bucket 0,
    values above borders[-1] gather nothing.
    """
    borders = jnp.asarray(borders, jnp.float32)
    num_bars = borders.shape[0] - 1
    assert logits.shape[-1] == num_bars, (logits.shape, num_bars)
    lead_shape = logits.shape[:-1]
    assert y.shape == lead_shape, (y.shape, lead_shape)

    # Native-dtype passthrough for logits (bf16 stays bf16 in HBM); y is tiny.
    logits2 = logits.reshape(-1, num_bars)
    y2 = y.reshape(-1, 1).astype(jnp.float32)
    n = logits2.shape[0]

    # Loop-invariant bucket tables, computed once (O(num_bars)).
    widths = borders[1:] - borders[:-1]
    log_widths = jnp.log(widths).reshape(1, num_bars)
    upper = borders[1:].reshape(1, num_bars)
    lower_cmp = jnp.concatenate(
        [jnp.full((1,), -jnp.inf, jnp.float32), borders[1:-1]]).reshape(1, num_bars)

    # Sublane tile for the streamed dtype: 8 (f32) / 16 (bf16, f16) / 32 (8-bit).
    itemsize = jnp.dtype(logits2.dtype).itemsize
    sublane = 8 * max(1, 4 // max(itemsize, 1))

    # Row budget from physical VMEM: double-buffered input block + ~4 f32 (T,B)
    # temporaries ~= 6x an f32 block, keep total well under the scoped limit.
    vmem_cap = _vmem_capacity_bytes()
    target_block_bytes = vmem_cap // 12
    bytes_per_row_f32 = max(num_bars * 4, 1)
    budget = target_block_bytes // bytes_per_row_f32
    budget = max(sublane, min(8192, (budget // sublane) * sublane))

    if n <= budget:
        if n >= 2 * sublane:
            # >=2 grid steps so the 'parallel' axis shards across v7x's 2 TensorCores.
            row_tile = _round_up(pl.cdiv(n, 2), sublane)
        else:
            row_tile = n                    # single full-extent block (no alignment needed)
    else:
        num_blocks = pl.cdiv(n, budget)
        # Balance block sizes so the edge block isn't much smaller than the rest.
        row_tile = _round_up(pl.cdiv(n, num_blocks), sublane)
    grid = (pl.cdiv(n, row_tile),)          # partial edge block handled by Pallas masking

    # ~48 MiB on v7x (64 MiB physical), ~96 MiB on v5e/v6e (128 MiB physical).
    vmem_limit = int(min(max(32 * 1024 * 1024, (vmem_cap * 3) // 4),
                         128 * 1024 * 1024))

    out = pl.pallas_call(
        _bar_dist_kernel,
        out_shape=jax.ShapeDtypeStruct((n, 1), jnp.float32),
        grid_spec=pltpu.PrefetchScalarGridSpec(
            num_scalar_prefetch=0,
            grid=grid,
            in_specs=[
                pl.BlockSpec((1, num_bars), lambda i: (0, 0)),          # lower edges
                pl.BlockSpec((1, num_bars), lambda i: (0, 0)),          # upper edges
                pl.BlockSpec((1, num_bars), lambda i: (0, 0)),          # log widths
                pl.BlockSpec((row_tile, num_bars), lambda i: (i, 0)),   # logits rows (native dtype)
                pl.BlockSpec((row_tile, 1), lambda i: (i, 0)),          # y rows
            ],
            out_specs=pl.BlockSpec((row_tile, 1), lambda i: (i, 0)),
        ),
        compiler_params=pltpu.CompilerParams(
            dimension_semantics=("parallel",),
            vmem_limit_bytes=vmem_limit,
        ),
    )(lower_cmp, upper, log_widths, logits2, y2)

    return out[:, 0].reshape(lead_shape)


def bar_distribution_forward_ref(borders, logits, y):
    """Pure-JAX reference (mirrors the PyTorch semantics)."""
    borders = jnp.asarray(borders, jnp.float32)
    num_bars = borders.shape[0] - 1
    widths = borders[1:] - borders[:-1]
    idx = jnp.searchsorted(borders, y, side="left") - 1
    idx = jnp.where(y == borders[0], 0, idx)
    idx = jnp.where(y == borders[-1], num_bars - 1, idx)
    logp = jax.nn.log_softmax(logits, axis=-1)
    scaled = logp - jnp.log(widths)
    return jnp.take_along_axis(scaled, idx[..., None], axis=-1)[..., 0]


if __name__ == "__main__":
    key = jax.random.PRNGKey(0)
    k1, k2, k3, k4 = jax.random.split(key, 4)

    num_bars = 64
    borders = jnp.linspace(-1.0, 1.0, num_bars + 1, dtype=jnp.float32)

    # Test 1: f32 logits, small shapes, exact-border edge cases, >=2-step grid.
    seq, batch = 8, 2
    logits = jax.random.normal(k1, (seq, batch, num_bars), dtype=jnp.float32)
    y = jax.random.uniform(k2, (seq, batch), dtype=jnp.float32,
                           minval=-0.999, maxval=0.999)
    y = y.at[0, 0].set(borders[0])     # left edge  -> bucket 0
    y = y.at[0, 1].set(borders[-1])    # right edge -> bucket num_bars-1
    y = y.at[1, 0].set(borders[3])     # interior-border tie -> left bucket (2)

    out = jax.block_until_ready(bar_distribution_forward(borders, logits, y))
    ref = bar_distribution_forward_ref(borders, logits, y)
    assert out.shape == y.shape
    assert jnp.allclose(out, ref, atol=1e-5, rtol=1e-5), (out, ref)

    # Test 2: bf16 logits (native-dtype streaming path) with a partial edge block.
    seq2, batch2 = 40, 2
    logits_bf16 = jax.random.normal(
        k3, (seq2, batch2, num_bars), dtype=jnp.float32).astype(jnp.bfloat16)
    y_b = jax.random.uniform(k4, (seq2, batch2), dtype=jnp.float32,
                             minval=-0.999, maxval=0.999)
    out_b = jax.block_until_ready(bar_distribution_forward(borders, logits_bf16, y_b))
    ref_b = bar_distribution_forward_ref(borders, logits_bf16.astype(jnp.float32), y_b)
    assert out_b.shape == y_b.shape
    assert jnp.allclose(out_b, ref_b, atol=1e-5, rtol=1e-5), (out_b, ref_b)

    print("KERNEL_OK")
</pallas_src>

<mosaic_0001>
module attributes {stable_mosaic.version = 11 : i64} {
  func.func @_bar_dist_kernel(%arg0: i32, %arg1: memref<1x64xf32, #tpu.memory_space<vmem>>, %arg2: memref<1x64xf32, #tpu.memory_space<vmem>>, %arg3: memref<1x64xf32, #tpu.memory_space<vmem>>, %arg4: memref<8x64xf32, #tpu.memory_space<vmem>>, %arg5: memref<8x1xf32, #tpu.memory_space<vmem>>, %arg6: memref<8x1xf32, #tpu.memory_space<vmem>>) attributes {dimension_semantics = [#tpu.dimension_semantics<parallel>], iteration_bounds = array<i64: 2>, scalar_prefetch = 0 : i64, scratch_operands = 0 : i64, tpu.core_type = #tpu.core_type<tc>, window_params = [{pipeline_mode = #tpu.pipeline_mode<synchronous>, transform_indices = @transform_0, window_bounds = array<i64: 1, 64>}, {pipeline_mode = #tpu.pipeline_mode<synchronous>, transform_indices = @transform_1, window_bounds = array<i64: 1, 64>}, {pipeline_mode = #tpu.pipeline_mode<synchronous>, transform_indices = @transform_2, window_bounds = array<i64: 1, 64>}, {transform_indices = @transform_3, window_bounds = array<i64: 8, 64>}, {transform_indices = @transform_4, window_bounds = array<i64: 8, 1>}, {transform_indices = @transform_5, window_bounds = array<i64: 8, 1>}]} {
    %c0 = arith.constant 0 : index
    %c0_0 = arith.constant 0 : index
    %0 = vector.load %arg1[%c0, %c0_0] : memref<1x64xf32, #tpu.memory_space<vmem>>, vector<1x64xf32>
    %c0_1 = arith.constant 0 : index
    %c0_2 = arith.constant 0 : index
    %1 = vector.load %arg2[%c0_1, %c0_2] : memref<1x64xf32, #tpu.memory_space<vmem>>, vector<1x64xf32>
    %c0_3 = arith.constant 0 : index
    %c0_4 = arith.constant 0 : index
    %2 = vector.load %arg3[%c0_3, %c0_4] : memref<1x64xf32, #tpu.memory_space<vmem>>, vector<1x64xf32>
    %c0_5 = arith.constant 0 : index
    %c0_6 = arith.constant 0 : index
    %3 = vector.load %arg4[%c0_5, %c0_6] : memref<8x64xf32, #tpu.memory_space<vmem>>, vector<8x64xf32>
    %c0_7 = arith.constant 0 : index
    %c0_8 = arith.constant 0 : index
    %4 = vector.load %arg5[%c0_7, %c0_8] : memref<8x1xf32, #tpu.memory_space<vmem>>, vector<8x1xf32>
    %cst = arith.constant dense<0xFF800000> : vector<8xf32>
    %5 = vector.multi_reduction <maximumf>, %3, %cst [1] : vector<8x64xf32> to vector<8xf32>
    %6 = vector.shape_cast %5 : vector<8xf32> to vector<8x1xf32>
    %7 = vector.broadcast %6 : vector<8x1xf32> to vector<8x64xf32>
    %8 = arith.subf %3, %7 : vector<8x64xf32>
    %9 = math.exp %8 : vector<8x64xf32>
    %cst_9 = arith.constant dense<0.000000e+00> : vector<8xf32>
    %10 = vector.multi_reduction <add>, %9, %cst_9 [1] : vector<8x64xf32> to vector<8xf32>
    %11 = vector.shape_cast %10 : vector<8xf32> to vector<8x1xf32>
    %12 = vector.broadcast %4 : vector<8x1xf32> to vector<8x64xf32>
    %13 = vector.broadcast %0 : vector<1x64xf32> to vector<8x64xf32>
    %14 = arith.cmpf ogt, %12, %13 : vector<8x64xf32>
    %15 = vector.broadcast %4 : vector<8x1xf32> to vector<8x64xf32>
    %16 = vector.broadcast %1 : vector<1x64xf32> to vector<8x64xf32>
    %17 = arith.cmpf ole, %15, %16 : vector<8x64xf32>
    %18 = arith.andi %14, %17 : vector<8x64xi1>
    %19 = vector.broadcast %2 : vector<1x64xf32> to vector<8x64xf32>
    %20 = arith.subf %8, %19 : vector<8x64xf32>
    %cst_10 = arith.constant 0.000000e+00 : f32
    %21 = vector.broadcast %cst_10 : f32 to vector<8x64xf32>
    %22 = arith.select %18, %20, %21 : vector<8x64xi1>, vector<8x64xf32>
    %cst_11 = arith.constant dense<0.000000e+00> : vector<8xf32>
    %23 = vector.multi_reduction <add>, %22, %cst_11 [1] : vector<8x64xf32> to vector<8xf32>
    %24 = vector.shape_cast %23 : vector<8xf32> to vector<8x1xf32>
    %25 = math.log %11 : vector<8x1xf32>
    %26 = arith.subf %24, %25 : vector<8x1xf32>
    %c0_12 = arith.constant 0 : index
    %c0_13 = arith.constant 0 : index
    %27 = vector.load %arg6[%c0_12, %c0_13] : memref<8x1xf32, #tpu.memory_space<vmem>>, vector<8x1xf32>
    tpu.vector_store %arg6[%c0_12, %c0_13], %26 {strides = array<i32>} : memref<8x1xf32, #tpu.memory_space<vmem>>, vector<8x1xf32>,
    return
  }
  func.func @transform_0(%arg0: i32) -> (i32, i32) {
    %c0_i32 = arith.constant 0 : i32
    %c0_i32_0 = arith.constant 0 : i32
    %c0_i32_1 = arith.constant 0 : i32
    return %c0_i32, %c0_i32_0 : i32, i32
  }
  func.func @transform_1(%arg0: i32) -> (i32, i32) {
    %c0_i32 = arith.constant 0 : i32
    %c0_i32_0 = arith.constant 0 : i32
    %c0_i32_1 = arith.constant 0 : i32
    return %c0_i32, %c0_i32_0 : i32, i32
  }
  func.func @transform_2(%arg0: i32) -> (i32, i32) {
    %c0_i32 = arith.constant 0 : i32
    %c0_i32_0 = arith.constant 0 : i32
    %c0_i32_1 = arith.constant 0 : i32
    return %c0_i32, %c0_i32_0 : i32, i32
  }
  func.func @transform_3(%arg0: i32) -> (i32, i32) {
    %c0_i32 = arith.constant 0 : i32
    %c0_i32_0 = arith.constant 0 : i32
    return %arg0, %c0_i32 : i32, i32
  }
  func.func @transform_4(%arg0: i32) -> (i32, i32) {
    %c0_i32 = arith.constant 0 : i32
    %c0_i32_0 = arith.constant 0 : i32
    return %arg0, %c0_i32 : i32, i32
  }
  func.func @transform_5(%arg0: i32) -> (i32, i32) {
    %c0_i32 = arith.constant 0 : i32
    %c0_i32_0 = arith.constant 0 : i32
    return %arg0, %c0_i32 : i32, i32
  }
}

</mosaic_0001>

<llo_original>
// kernel: tpu_custom_call.1
$region0: #{tpu_custom_call.1}
  #allocation0 [shape = 'u32[]', space=smem, size = 0x4, offset = 0x4, fixed_abs, tag = 'smem constant byte address 0x4 - core index']
  #allocation1 [shape = 'u32[144,128]{1,0:T(1,128)}', space=vmem, size = 0x12000, scoped, tag = 'internal scratch']
  %s0 = inlined_call_operand.vmem [shape: f32[1,64], index: 0, kind: input, shape index: {}]
  %s1 = inlined_call_operand.vmem [shape: f32[1,64], index: 1, kind: input, shape index: {}]
  %s2 = inlined_call_operand.vmem [shape: f32[1,64], index: 2, kind: input, shape index: {}]
  %s3 = inlined_call_operand.vmem [shape: f32[16,64], index: 3, kind: input, shape index: {}]
  %s4 = inlined_call_operand.vmem [shape: f32[16,1], index: 4, kind: input, shape index: {}]
  %s5 = inlined_call_operand.vmem [shape: f32[16,1], index: 5, kind: output, shape index: {}]
  %s6 = sld [smem:[#allocation0]]
  $region53: #{tpu_custom_call.1} parent=0
    _
  %s8 = ssub.s32 1, %s6
  %s9 = scalar_select 0, %s8, %s6
  loop: start=0, step=1, limit=4
  $region2: #{tpu_custom_call.1} parent=0 // loop_pre_header
    _
  $region3: #{tpu_custom_call.1} parent=0 // loop_header
    %s11 = sphi 0, %s15
    %p12 = scmp.ge.s32.totalorder %s11, 4
    %s19 = sphi 0, %s19
    %s21 = sphi 0, %s19
    %s22 = sphi 0, %s21
    %s36 = sphi 0, %s22
    %s40 = sphi 0, %s40
    %s42 = sphi 0, %s40
    %s43 = sphi 0, %s42
    %s57 = sphi 0, %s43
    %s61 = sphi 0, %s61
    %s63 = sphi 0, %s61
    %s64 = sphi 0, %s63
    %s78 = sphi 0, %s64
    %s84 = sphi 0, %s86
    %s87 = sphi 0, %s84
    %s88 = sphi 0, %s87
    %s104 = sphi 0, %s88
    %s110 = sphi 0, %s112
    %s113 = sphi 0, %s110
    %s114 = sphi 0, %s113
    %s130 = sphi 0, %s114
    %s136 = sphi 0, %s138
    %s139 = sphi 0, %s136
    %s140 = sphi 0, %s139
    %s156 = sphi 0, %s140
  $region4: #{tpu_custom_call.1} parent=0 // loop_header_branch
    %14 = sbr.rel (%p12) target = $region8
  $region5: #{tpu_custom_call.1} parent=0 // loop_body
    %s16 = ssub.s32 %s11, 1
    %s17 = ssub.s32 %s11, 2
    %s18 = sadd.s32 %s11, 1
    %s20 = sadd.s32 %s19, 1
    %p23 = scmp.eq.s32.totalorder %s11, 1
    %p24 = scmp.ne.s32.totalorder %s19, %s21
    %p25 = scmp.eq.s32.totalorder %s11, 0
    %p26 = por %p24, %p25
    %p27 = scmp.ne.s32.totalorder %s19, %s21
    %p28 = scmp.eq.s32.totalorder %s16, 1
    %p29 = por %p27, %p28
    %p30 = scmp.ne.s32.totalorder %s21, %s22
    %p31 = scmp.eq.s32.totalorder %s16, 0
    %p32 = por %p30, %p31
    %p33 = scmp.ne.s32.totalorder %s21, %s22
    %p34 = scmp.eq.s32.totalorder %s17, 1
    %p35 = por %p33, %p34
    %p37 = scmp.ne.s32.totalorder %s22, %s36
    %p38 = scmp.eq.s32.totalorder %s17, 0
    %p39 = por %p37, %p38
    %s41 = sadd.s32 %s40, 1
    %p44 = scmp.eq.s32.totalorder %s11, 1
    %p45 = scmp.ne.s32.totalorder %s40, %s42
    %p46 = scmp.eq.s32.totalorder %s11, 0
    %p47 = por %p45, %p46
    %p48 = scmp.ne.s32.totalorder %s40, %s42
    %p49 = scmp.eq.s32.totalorder %s16, 1
    %p50 = por %p48, %p49
    %p51 = scmp.ne.s32.totalorder %s42, %s43
    %p52 = scmp.eq.s32.totalorder %s16, 0
    %p53 = por %p51, %p52
    %p54 = scmp.ne.s32.totalorder %s42, %s43
    %p55 = scmp.eq.s32.totalorder %s17, 1
    %p56 = por %p54, %p55
    %p58 = scmp.ne.s32.totalorder %s43, %s57
    %p59 = scmp.eq.s32.totalorder %s17, 0
    %p60 = por %p58, %p59
    %s62 = sadd.s32 %s61, 1
    %p65 = scmp.eq.s32.totalorder %s11, 1
    %p66 = scmp.ne.s32.totalorder %s61, %s63
    %p67 = scmp.eq.s32.totalorder %s11, 0
    %p68 = por %p66, %p67
    %p69 = scmp.ne.s32.totalorder %s61, %s63
    %p70 = scmp.eq.s32.totalorder %s16, 1
    %p71 = por %p69, %p70
    %p72 = scmp.ne.s32.totalorder %s63, %s64
    %p73 = scmp.eq.s32.totalorder %s16, 0
    %p74 = por %p72, %p73
    %p75 = scmp.ne.s32.totalorder %s63, %s64
    %p76 = scmp.eq.s32.totalorder %s17, 1
    %p77 = por %p75, %p76
    %p79 = scmp.ne.s32.totalorder %s64, %s78
    %p80 = scmp.eq.s32.totalorder %s17, 0
    %p81 = por %p79, %p80
    %s82 = ssub.s32 %s11, %s18
    %p83 = scmp.eq.s32.totalorder %s82, 0
    %s85 = sadd.s32 %s84, 1
    %s86 = scalar_select %p83, %s84, %s85
    %p89 = pneg %p83
    %p90 = scmp.eq.s32.totalorder %s11, 1
    %p91 = por %p89, %p90
    %p92 = scmp.ne.s32.totalorder %s84, %s87
    %p93 = scmp.eq.s32.totalorder %s11, 0
    %p94 = por %p92, %p93
    %p95 = scmp.ne.s32.totalorder %s84, %s87
    %p96 = scmp.eq.s32.totalorder %s16, 1
    %p97 = por %p95, %p96
    %p98 = scmp.ne.s32.totalorder %s87, %s88
    %p99 = scmp.eq.s32.totalorder %s16, 0
    %p100 = por %p98, %p99
    %p101 = scmp.ne.s32.totalorder %s87, %s88
    %p102 = scmp.eq.s32.totalorder %s17, 1
    %p103 = por %p101, %p102
    %p105 = scmp.ne.s32.totalorder %s88, %s104
    %p106 = scmp.eq.s32.totalorder %s17, 0
    %p107 = por %p105, %p106
    %s108 = ssub.s32 %s11, %s18
    %p109 = scmp.eq.s32.totalorder %s108, 0
    %s111 = sadd.s32 %s110, 1
    %s112 = scalar_select %p109, %s110, %s111
    %p115 = pneg %p109
    %p116 = scmp.eq.s32.totalorder %s11, 1
    %p117 = por %p115, %p116
    %p118 = scmp.ne.s32.totalorder %s110, %s113
    %p119 = scmp.eq.s32.totalorder %s11, 0
    %p120 = por %p118, %p119
    %p121 = scmp.ne.s32.totalorder %s110, %s113
    %p122 = scmp.eq.s32.totalorder %s16, 1
    %p123 = por %p121, %p122
    %p124 = scmp.ne.s32.totalorder %s113, %s114
    %p125 = scmp.eq.s32.totalorder %s16, 0
    %p126 = por %p124, %p125
    %p127 = scmp.ne.s32.totalorder %s113, %s114
    %p128 = scmp.eq.s32.totalorder %s17, 1
    %p129 = por %p127, %p128
    %p131 = scmp.ne.s32.totalorder %s114, %s130
    %p132 = scmp.eq.s32.totalorder %s17, 0
    %p133 = por %p131, %p132
    %s134 = ssub.s32 %s11, %s18
    %p135 = scmp.eq.s32.totalorder %s134, 0
    %s137 = sadd.s32 %s136, 1
    %s138 = scalar_select %p135, %s136, %s137
    %p141 = pneg %p135
    %p142 = scmp.eq.s32.totalorder %s11, 1
    %p143 = por %p141, %p142
    %p144 = scmp.ne.s32.totalorder %s136, %s139
    %p145 = scmp.eq.s32.totalorder %s11, 0
    %p146 = por %p144, %p145
    %p147 = scmp.ne.s32.totalorder %s136, %s139
    %p148 = scmp.eq.s32.totalorder %s16, 1
    %p149 = por %p147, %p148
    %p150 = scmp.ne.s32.totalorder %s139, %s140
    %p151 = scmp.eq.s32.totalorder %s16, 0
    %p152 = por %p150, %p151
    %p153 = scmp.ne.s32.totalorder %s139, %s140
    %p154 = scmp.eq.s32.totalorder %s17, 1
    %p155 = por %p153, %p154
    %p157 = scmp.ne.s32.totalorder %s140, %s156
    %p158 = scmp.eq.s32.totalorder %s17, 0
    %p159 = por %p157, %p158
    %p160 = scmp.le.s32.totalorder 1, %s11
    %p161 = scmp.lt.s32.totalorder %s11, 3
    %p162 = pnand %p160, %p161
    %p163 = pneg %p162
    // Predicated region
    $region9: #{tpu_custom_call.1} parent=5 // pred_check
      _
    $region10: #{tpu_custom_call.1} parent=5 // pred_check_branch
      %165 = sbr.rel (%p162) target = $region12
    $region11: #{tpu_custom_call.1} parent=5 // pred_region
      %s166 = ssub.s32 %s11, 1
      // Predicated region
      $region13: #{tpu_custom_call.1} parent=11 // pred_check
        %p167 = pneg %p32
      $region14: #{tpu_custom_call.1} parent=11 // pred_check_branch
        %169 = sbr.rel (%p167) target = $region16
      $region15: #{tpu_custom_call.1} parent=11 // pred_region
        _
      $region16: #{tpu_custom_call.1} parent=11 // pred_fallthru
        _
      // Predicated region
      $region17: #{tpu_custom_call.1} parent=11 // pred_check
        %p170 = pneg %p53
      $region18: #{tpu_custom_call.1} parent=11 // pred_check_branch
        %172 = sbr.rel (%p170) target = $region20
      $region19: #{tpu_custom_call.1} parent=11 // pred_region
        _
      $region20: #{tpu_custom_call.1} parent=11 // pred_fallthru
        _
      // Predicated region
      $region21: #{tpu_custom_call.1} parent=11 // pred_check
        %p173 = pneg %p74
      $region22: #{tpu_custom_call.1} parent=11 // pred_check_branch
        %175 = sbr.rel (%p173) target = $region24
      $region23: #{tpu_custom_call.1} parent=11 // pred_region
        _
      $region24: #{tpu_custom_call.1} parent=11 // pred_fallthru
        _
    $region12: #{tpu_custom_call.1} parent=5 // pred_fallthru
      _
    %p176 = scmp.lt.s32.totalorder %s11, 2
    // Predicated region
    $region25: #{tpu_custom_call.1} parent=5 // pred_check
      %p177 = pneg %p176
    $region26: #{tpu_custom_call.1} parent=5 // pred_check_branch
      %179 = sbr.rel (%p177) target = $region28
    $region27: #{tpu_custom_call.1} parent=5 // pred_region
      // Predicated region
      $region29: #{tpu_custom_call.1} parent=27 // pred_check
        %p180 = pneg %p94
      $region30: #{tpu_custom_call.1} parent=27 // pred_check_branch
        %182 = sbr.rel (%p180) target = $region32
      $region31: #{tpu_custom_call.1} parent=27 // pred_region
        %p183 = scmp.lt.s32.totalorder %s11, 1
        %s184 = scalar_select %p183, %s11, 1
        %s185 = smul.addr %s184, 8
        %s186 = scalar_lea.vmem %s3, %s185
      $region32: #{tpu_custom_call.1} parent=27 // pred_fallthru
        _
      // Predicated region
      $region33: #{tpu_custom_call.1} parent=27 // pred_check
        %p187 = pneg %p120
      $region34: #{tpu_custom_call.1} parent=27 // pred_check_branch
        %189 = sbr.rel (%p187) target = $region36
      $region35: #{tpu_custom_call.1} parent=27 // pred_region
        %p190 = scmp.lt.s32.totalorder %s11, 1
        %s191 = scalar_select %p190, %s11, 1
        %s192 = smul.addr %s191, 8
        %s193 = scalar_lea.vmem %s4, %s192
      $region36: #{tpu_custom_call.1} parent=27 // pred_fallthru
        _
    $region28: #{tpu_custom_call.1} parent=5 // pred_fallthru
      _
    %p194 = scmp.le.s32.totalorder 1, %s11
    %p195 = scmp.lt.s32.totalorder %s11, 3
    %p196 = pnand %p194, %p195
    %p197 = pneg %p196
    // Predicated region
    $region37: #{tpu_custom_call.1} parent=5 // pred_check
      _
    $region38: #{tpu_custom_call.1} parent=5 // pred_check_branch
      %199 = sbr.rel (%p196) target = $region40
    $region39: #{tpu_custom_call.1} parent=5 // pred_region
      %s200 = ssub.s32 %s11, 1
      %p201 = pneg %p32
      %p202 = pneg %p29
      %p203 = pneg %p53
      %p204 = pneg %p50
      %p205 = pneg %p74
      %p206 = pneg %p71
      %p207 = scmp.lt.s32.totalorder %s16, 1
      %s208 = scalar_select %p207, %s16, 1
      %s209 = smul.addr %s208, 8
      %s210 = scalar_lea.vmem %s3, %s209
      %p211 = pneg %p100
      %p212 = pneg %p97
      %p213 = scmp.lt.s32.totalorder %s16, 1
      %s214 = scalar_select %p213, %s16, 1
      %s215 = smul.addr %s214, 8
      %s216 = scalar_lea.vmem %s4, %s215
      %p217 = pneg %p126
      %p218 = pneg %p123
      %p219 = pneg %p152
      %p220 = pneg %p149
      %p221 = scmp.lt.s32.totalorder %s16, 1
      %s222 = scalar_select %p221, %s16, 1
      %s223 = smul.addr %s222, 8
      %s224 = scalar_lea.vmem %s5, %s223
      %p225 = scmp.lt.s32.totalorder %s16, 1
      %s226 = scalar_select %p225, %s16, 1
      %s227 = smul.addr %s226, 8
      %s228 = scalar_lea.vmem %s3, %s227
      %p229 = scmp.lt.s32.totalorder %s16, 1
      %s230 = scalar_select %p229, %s16, 1
      %s231 = smul.addr %s230, 8
      %s232 = scalar_lea.vmem %s4, %s231
      %p233 = scmp.lt.s32.totalorder %s16, 1
      %s234 = scalar_select %p233, %s16, 1
      %s235 = smul.addr %s234, 8
      %s236 = scalar_lea.vmem %s5, %s235
      %v237 = vld [vmem:[%s0] sm:$0x1]
      %v238 = vld [vmem:[%s1] sm:$0x1]
      %v239 = vld [vmem:[%s2] sm:$0x1]
      %v240 = vld [vmem:[%s228] sm:$0xff]
      %v241 = vld [vmem:[%s232] sm:$0xff]
      %vm242 = vcmask 523264
      %v243 = vsel %vm242, %v240, -inf
      %244 = vmax.xlane.f32.xlu0 %v243
      %v245 = vpop.xlane.xlu0 %244
      %v246 = vsub.f32 %v240, %v245
      %v247 = vmul.f32 %v246, 1.442695
      %v248 = vpow.pop %v247
      %v249 = vsel %vm242, %v248, 0.0
      %250 = vadd.xlane.f32.xlu0 %v249
      %v251 = vpop.xlane.xlu0 %250
      %253 = vset.pattern.permute.xlu0 0
      %254 = vperm.xlu0 %253, %v241
      %v255 = vpop.permute.xlu0 %254
      %v258 = vlaneseq
      %v259 = vshrl.u32 %v258, 7
      %v260 = vsub.s32 0, %v259
      %v261 = vrot.slane %v237, %v260
      %vm263 = vcmp.gt.f32.partialorder %v255, %v261
      %v265 = vlaneseq
      %v266 = vshrl.u32 %v265, 7
      %v267 = vsub.s32 0, %v266
      %v268 = vrot.slane %v238, %v267
      %vm270 = vcmp.le.f32.partialorder %v255, %v268
      %vm271 = vmand %vm263, %vm270
      %v273 = vlaneseq
      %v274 = vshrl.u32 %v273, 7
      %v275 = vsub.s32 0, %v274
      %v276 = vrot.slane %v239, %v275
      %v278 = vsub.f32 %v246, %v276
      %v279 = vsel %vm271, %v278, 0.0
      %v280 = vsel %vm242, %v279, 0.0
      %281 = vadd.xlane.f32.xlu0 %v280
      %v282 = vpop.xlane.xlu0 %281
      %v283 = vlog2.pop %v251
      %v284 = vmul.f32 %v283, 0.6931472
      %v285 = vsub.f32 %v282, %v284
      %vm286 = vcmask 7168
      %287 = vst.msk [vmem:[%s236] sm:$0xff] %vm286, %v285
      %p288 = scmp.lt.s32.totalorder %s16, 1
      %s289 = scalar_select %p288, %s16, 1
      %s290 = smul.addr %s289, 8
      %s291 = scalar_lea.vmem %s5, %s290
      // Predicated region
      $region41: #{tpu_custom_call.1} parent=39 // pred_check
        %p292 = pneg %p149
      $region42: #{tpu_custom_call.1} parent=39 // pred_check_branch
        %294 = sbr.rel (%p292) target = $region44
      $region43: #{tpu_custom_call.1} parent=39 // pred_region
        _
      $region44: #{tpu_custom_call.1} parent=39 // pred_fallthru
        _
    $region40: #{tpu_custom_call.1} parent=5 // pred_fallthru
      _
    %p295 = scmp.le.s32.totalorder 2, %s11
    // Predicated region
    $region45: #{tpu_custom_call.1} parent=5 // pred_check
      %p296 = pneg %p295
    $region46: #{tpu_custom_call.1} parent=5 // pred_check_branch
      %298 = sbr.rel (%p296) target = $region48
    $region47: #{tpu_custom_call.1} parent=5 // pred_region
      %s299 = ssub.s32 %s11, 2
      // Predicated region
      $region49: #{tpu_custom_call.1} parent=47 // pred_check
        %p300 = pneg %p155
      $region50: #{tpu_custom_call.1} parent=47 // pred_check_branch
        %302 = sbr.rel (%p300) target = $region52
      $region51: #{tpu_custom_call.1} parent=47 // pred_region
        %p303 = scmp.lt.s32.totalorder %s17, 1
        %s304 = scalar_select %p303, %s17, 1
        %s305 = smul.addr %s304, 8
        %s306 = scalar_lea.vmem %s5, %s305
      $region52: #{tpu_custom_call.1} parent=47 // pred_fallthru
        _
    $region48: #{tpu_custom_call.1} parent=5 // pred_fallthru
      _
  $region6: #{tpu_custom_call.1} parent=0 // loop_footer
    %s15 = sadd.s32 1, %s11
  $region7: #{tpu_custom_call.1} parent=0 // loop_footer_branch
    %10 = sbr.rel target = $region3
  $region8: #{tpu_custom_call.1} parent=0 // loop_exit
    _

</llo_original>
